<compile_context>
chip_gen: v5e
topology: v5e:2x2
jax: 0.10.0
libtpu: 0.0.40
codegen_flags: <defaults>
</compile_context>

<pallas_src>
import functools

import jax
import jax.numpy as jnp
from jax.experimental import pallas as pl
from jax.experimental.pallas import tpu as pltpu


# ---------------------------------------------------------------------------
# Kernels
# ---------------------------------------------------------------------------

def _fused_kernel(compute_in_bf16, x_ref, out_ref, stats_ref):
    """Single-pass path: in-block batch mean + per-feature stats + apply."""
    x_in = x_ref[...]                                                  # (B, TF)
    x_mean = jnp.mean(x_in.astype(jnp.float32), axis=0, keepdims=True)  # (1, TF) f32
    mask = x_mean <= 0.5                                               # (1, TF) bool
    # Select the valid branch (avoids inf*0 -> NaN of the masked-multiply form).
    y = jnp.where(mask, (0.5 - x_mean) / (1.0 - x_mean), 0.5 / x_mean)  # (1, TF) f32

    # Fused small-output block: row 0 = y, row 1 = l (mask as f32).
    stats_ref[0:1, :] = y
    stats_ref[1:2, :] = mask.astype(jnp.float32)

    # Hot path:  l*(y*(1-x)+x) + g*(y*x)  ==  where(mask, x + y - y*x, y*x)
    if compute_in_bf16:
        xc = x_in
        yc = y.astype(jnp.bfloat16)
    else:
        xc = x_in.astype(jnp.float32)
        yc = y
    p = yc * xc
    out = jnp.where(mask, xc + yc - p, p)
    out_ref[...] = out.astype(out_ref.dtype)


def _stats_kernel(inv_b, x_ref, stats_ref, acc_ref):
    """Two-pass path, pass 1: batch-tiled per-feature mean -> (y, l) stats."""
    b = pl.program_id(1)

    @pl.when(b == 0)
    def _init():
        acc_ref[...] = jnp.zeros_like(acc_ref)

    acc_ref[...] += jnp.sum(x_ref[...].astype(jnp.float32), axis=0, keepdims=True)

    @pl.when(b == pl.num_programs(1) - 1)
    def _finalize():
        x_mean = acc_ref[...] * inv_b
        mask = x_mean <= 0.5
        y = jnp.where(mask, (0.5 - x_mean) / (1.0 - x_mean), 0.5 / x_mean)
        stats_ref[0:1, :] = y
        stats_ref[1:2, :] = mask.astype(jnp.float32)


def _apply_kernel(compute_in_bf16, x_ref, stats_ref, out_ref):
    """Two-pass path, pass 2: elementwise apply of precomputed (y, l)."""
    y = stats_ref[0:1, :]                                              # (1, TF) f32
    mask = stats_ref[1:2, :] > 0.5                                     # (1, TF) bool
    if compute_in_bf16:
        xc = x_ref[...]
        yc = y.astype(jnp.bfloat16)
    else:
        xc = x_ref[...].astype(jnp.float32)
        yc = y
    p = yc * xc
    out_ref[...] = jnp.where(mask, xc + yc - p, p).astype(out_ref.dtype)


# ---------------------------------------------------------------------------
# Generation detection & tile sizing
# ---------------------------------------------------------------------------

# gen -> (per-step block budget, vmem_limit cap, two TCs?, bf16 VPU?)
_GEN_TABLE = {
    "v5e":  (40 << 20, 96 << 20, False, False),
    "v6e":  (40 << 20, 96 << 20, False, True),
    "v7x":  (22 << 20, 48 << 20, True,  True),
    "other": (16 << 20, 48 << 20, False, False),
}


def _tpu_generation():
    try:
        kind = jax.devices()[0].device_kind.lower()
    except Exception:
        return "other"
    if "v5 lite" in kind or "v5e" in kind or "v5lite" in kind:
        return "v5e"
    if "v6" in kind:
        return "v6e"
    if "v7" in kind or "7x" in kind or "tpu7" in kind:
        return "v7x"
    return "other"


def _gen_params():
    gen = _tpu_generation()
    budget, cap, two_core, bf16_vpu = _GEN_TABLE.get(gen, _GEN_TABLE["other"])
    try:  # refine against actual physical VMEM when queryable
        phys = int(pltpu.get_tpu_info().vmem_capacity_bytes)
        cap = min(cap, (phys * 3) // 4)
        budget = min(budget, phys // 3)
    except Exception:
        pass
    return budget, cap, two_core, bf16_vpu


def _step_bytes(rows, lanes, itemsize):
    # double-buffered x + out blocks, ~2 f32 (rows, lanes) temporaries, stats.
    return 4 * rows * lanes * itemsize + 2 * rows * lanes * 4 + 64 * lanes


def _feature_tile_candidates(F):
    if F >= 128 and F % 128 == 0:
        return sorted({t for t in range(128, F + 1, 128) if F % t == 0}, reverse=True)
    return [F]  # full-extent last dim is always a legal block dim


def _choose_tf_fused(B, F, itemsize, budget, two_core):
    """Largest lane-dense feature tile whose (whole-batch) block fits `budget`.

    Returns None when even the smallest tile does not fit (-> two-pass path).
    On two-TC chips, prefer an even number of grid steps (>= 2) so both
    TensorCores get equal work, without shrinking the x block below ~1 MiB
    (or below half of the largest feasible block for tiny problems).
    """
    cands = _feature_tile_candidates(F)
    feasible = [t for t in cands if _step_bytes(B, t, itemsize) <= budget]
    if not feasible:
        return None
    best = feasible[0]
    if two_core:
        min_x_bytes = min(1 << 20, (B * best * itemsize) // 2)
        for t in feasible:
            steps = F // t
            if steps >= 2 and steps % 2 == 0 and B * t * itemsize >= min_x_bytes:
                return t
    return best


def _choose_two_pass_tiles(B, F, itemsize, budget):
    """Tiles for the large-batch path: lane-dense tf (~512) + biggest batch tile."""
    tf_cands = _feature_tile_candidates(F)
    tf = next((t for t in tf_cands if t <= 512), tf_cands[-1])
    if B >= 8 and B % 8 == 0:
        bt_cands = sorted({t for t in range(8, B + 1, 8) if B % t == 0}, reverse=True)
    else:
        bt_cands = [B]
    for bt in bt_cands:
        if _step_bytes(bt, tf, itemsize) <= budget:
            return bt, tf
    # TODO(synk): pathological shapes (huge B with no small divisor) would need
    # padding + masking; fall back to the smallest available tiles.
    return bt_cands[-1], tf_cands[-1]


def _vmem_limit(block_bytes, cap):
    # Never below the 32 MiB platform default (explicit raise on v5e's 16 MiB),
    # capped at ~3/4 of physical VMEM.
    return int(min(max(32 << 20, block_bytes + (8 << 20)), cap))


# ---------------------------------------------------------------------------
# Wrapper
# ---------------------------------------------------------------------------

def qc_norm_correction_try2(x, x_running_rot, momentum=0.1, *,
                            tile_f=None, tile_b=None, force_two_pass=False):
    """Training-mode forward.  Returns (x_1, new_running_rot, x_l_0_5, x_g_0_5)."""
    B, F = x.shape
    itemsize = jnp.dtype(x.dtype).itemsize
    budget, vmem_cap, two_core, bf16_vpu = _gen_params()
    compute_in_bf16 = bool(bf16_vpu and x.dtype == jnp.bfloat16)

    tf_fused = None
    if not force_two_pass:
        if tile_f is not None:
            tf_fused = tile_f
        else:
            tf_fused = _choose_tf_fused(B, F, itemsize, budget, two_core)

    if tf_fused is not None:
        # ---------------- single-pass fused path ----------------
        assert F % tf_fused == 0, "feature dim must be a multiple of the lane tile"
        n_steps = F // tf_fused
        vmem_limit = _vmem_limit(_step_bytes(B, tf_fused, itemsize), vmem_cap)

        x_spec = pl.BlockSpec((B, tf_fused), lambda j: (0, j))
        # Deeper prefetch only when the grid is long and per-step blocks small.
        if n_steps > 8 and B * tf_fused * itemsize < (256 << 10):
            x_spec = pl.BlockSpec((B, tf_fused), lambda j: (0, j),
                                  pipeline_mode=pl.Buffered(3))

        out, stats = pl.pallas_call(
            functools.partial(_fused_kernel, compute_in_bf16),
            out_shape=(
                jax.ShapeDtypeStruct((B, F), x.dtype),      # x_1 (keeps input dtype)
                jax.ShapeDtypeStruct((2, F), jnp.float32),  # row 0 = y, row 1 = l
            ),
            grid_spec=pltpu.PrefetchScalarGridSpec(
                num_scalar_prefetch=0,
                grid=(n_steps,),
                in_specs=[x_spec],
                out_specs=[
                    pl.BlockSpec((B, tf_fused), lambda j: (0, j)),
                    pl.BlockSpec((2, tf_fused), lambda j: (0, j)),
                ],
            ),
            compiler_params=pltpu.CompilerParams(
                dimension_semantics=("parallel",),
                vmem_limit_bytes=vmem_limit,
            ),
        )(x)
    else:
        # ---------------- two-pass large-batch path ----------------
        bt, tf = _choose_two_pass_tiles(B, F, itemsize, budget)
        if tile_b is not None:
            bt = tile_b
        if tile_f is not None:
            tf = tile_f
        assert B % bt == 0 and F % tf == 0
        vmem_limit = _vmem_limit(_step_bytes(bt, tf, itemsize), vmem_cap)

        # Pass 1: per-feature batch mean -> (y, l) stats (reduction axis last).
        stats = pl.pallas_call(
            functools.partial(_stats_kernel, 1.0 / float(B)),
            out_shape=jax.ShapeDtypeStruct((2, F), jnp.float32),
            grid_spec=pltpu.PrefetchScalarGridSpec(
                num_scalar_prefetch=0,
                grid=(F // tf, B // bt),
                in_specs=[pl.BlockSpec((bt, tf), lambda j, b: (b, j))],
                out_specs=pl.BlockSpec((2, tf), lambda j, b: (0, j)),
                scratch_shapes=[pltpu.VMEM((1, tf), jnp.float32)],
            ),
            compiler_params=pltpu.CompilerParams(
                dimension_semantics=("parallel", "arbitrary"),
                vmem_limit_bytes=vmem_limit,
            ),
        )(x)

        # Pass 2: elementwise apply, tiled over batch and features.
        out = pl.pallas_call(
            functools.partial(_apply_kernel, compute_in_bf16),
            out_shape=jax.ShapeDtypeStruct((B, F), x.dtype),
            grid_spec=pltpu.PrefetchScalarGridSpec(
                num_scalar_prefetch=0,
                grid=(B // bt, F // tf),
                in_specs=[
                    pl.BlockSpec((bt, tf), lambda i, j: (i, j)),
                    pl.BlockSpec((2, tf), lambda i, j: (0, j)),
                ],
                out_specs=pl.BlockSpec((bt, tf), lambda i, j: (i, j)),
            ),
            compiler_params=pltpu.CompilerParams(
                dimension_semantics=("parallel", "parallel"),
                vmem_limit_bytes=vmem_limit,
            ),
        )(x, stats)

    # Tiny F-sized epilogue in XLA: running-stat update (keeps buffer dtype)
    # and the exact complement g = 1 - l.
    y = stats[0]
    l = stats[1]
    g = 1.0 - l
    rot_f32 = x_running_rot.astype(jnp.float32)
    new_rot = (momentum * rot_f32 + (1.0 - momentum) * y).astype(x_running_rot.dtype)
    return out, new_rot, l, g


# ---------------------------------------------------------------------------
# Reference & test
# ---------------------------------------------------------------------------

def _reference(x, x_running_rot, momentum=0.1):
    xf = x.astype(jnp.float32)
    x_mean = jnp.mean(xf, axis=0)
    l = (x_mean <= 0.5).astype(jnp.float32)
    g = (x_mean > 0.5).astype(jnp.float32)
    y = l * ((0.5 - x_mean) / (1.0 - x_mean)) + g * (0.5 / x_mean)
    new_rot = momentum * x_running_rot.astype(jnp.float32) + (1.0 - momentum) * y
    x_1 = l * (y * (1.0 - xf) + xf) + g * (y * xf)
    return x_1.astype(x.dtype), new_rot.astype(x_running_rot.dtype), l, g


if __name__ == "__main__":
    key = jax.random.PRNGKey(0)
    k1, k2 = jax.random.split(key)

    # --- fused (single-pass) path ---
    B, F = 8, 1024
    x = jax.random.uniform(k1, (B, F), dtype=jnp.float32)       # values in [0, 1)
    rot = jnp.zeros((F,), dtype=jnp.float32)                    # param init: zeros

    out, new_rot, l, g = qc_norm_correction_try2(x, rot, momentum=0.1)
    jax.block_until_ready((out, new_rot, l, g))

    ro, rr, rl, rg = _reference(x, rot, momentum=0.1)
    assert jnp.allclose(out, ro, atol=1e-5, rtol=1e-5)
    assert jnp.allclose(new_rot, rr, atol=1e-5, rtol=1e-5)
    assert jnp.allclose(l, rl) and jnp.allclose(g, rg)

    # --- two-pass (large-batch fallback) path, exercised at small shapes ---
    B2, F2 = 32, 512
    x2 = jax.random.uniform(k2, (B2, F2), dtype=jnp.float32)
    rot2 = jnp.zeros((F2,), dtype=jnp.float32)
    out2, nr2, l2, g2 = qc_norm_correction_try2(
        x2, rot2, momentum=0.1, force_two_pass=True, tile_b=8, tile_f=128)
    jax.block_until_ready((out2, nr2, l2, g2))

    ro2, rr2, rl2, rg2 = _reference(x2, rot2, momentum=0.1)
    assert jnp.allclose(out2, ro2, atol=1e-5, rtol=1e-5)
    assert jnp.allclose(nr2, rr2, atol=1e-5, rtol=1e-5)
    assert jnp.allclose(l2, rl2) and jnp.allclose(g2, rg2)

    print("KERNEL_OK")
</pallas_src>

<mosaic_0001>
module attributes {stable_mosaic.version = 11 : i64} {
  func.func @_fused_kernel(%arg0: i32, %arg1: memref<8x1024xf32, #tpu.memory_space<vmem>>, %arg2: memref<8x1024xf32, #tpu.memory_space<vmem>>, %arg3: memref<2x1024xf32, #tpu.memory_space<vmem>>) attributes {dimension_semantics = [#tpu.dimension_semantics<parallel>], iteration_bounds = array<i64: 1>, scalar_prefetch = 0 : i64, scratch_operands = 0 : i64, tpu.core_type = #tpu.core_type<tc>, window_params = [{transform_indices = @transform_0, window_bounds = array<i64: 8, 1024>}, {transform_indices = @transform_1, window_bounds = array<i64: 8, 1024>}, {transform_indices = @transform_2, window_bounds = array<i64: 2, 1024>}]} {
    %c0 = arith.constant 0 : index
    %c0_0 = arith.constant 0 : index
    %0 = vector.load %arg1[%c0, %c0_0] : memref<8x1024xf32, #tpu.memory_space<vmem>>, vector<8x1024xf32>
    %cst = arith.constant dense<0.000000e+00> : vector<1024xf32>
    %1 = vector.multi_reduction <add>, %0, %cst [0] : vector<8x1024xf32> to vector<1024xf32>
    %2 = vector.shape_cast %1 : vector<1024xf32> to vector<1x1024xf32>
    %cst_1 = arith.constant 8.000000e+00 : f32
    %3 = vector.broadcast %cst_1 : f32 to vector<1x1024xf32>
    %4 = arith.divf %2, %3 : vector<1x1024xf32>
    %cst_2 = arith.constant 5.000000e-01 : f32
    %5 = vector.broadcast %cst_2 : f32 to vector<1x1024xf32>
    %6 = arith.cmpf ole, %4, %5 : vector<1x1024xf32>
    %cst_3 = arith.constant 5.000000e-01 : f32
    %7 = vector.broadcast %cst_3 : f32 to vector<1x1024xf32>
    %8 = arith.subf %7, %4 : vector<1x1024xf32>
    %cst_4 = arith.constant 1.000000e+00 : f32
    %9 = vector.broadcast %cst_4 : f32 to vector<1x1024xf32>
    %10 = arith.subf %9, %4 : vector<1x1024xf32>
    %11 = arith.divf %8, %10 : vector<1x1024xf32>
    %cst_5 = arith.constant 5.000000e-01 : f32
    %12 = vector.broadcast %cst_5 : f32 to vector<1x1024xf32>
    %13 = arith.divf %12, %4 : vector<1x1024xf32>
    %14 = arith.select %6, %11, %13 : vector<1x1024xi1>, vector<1x1024xf32>
    %c0_6 = arith.constant 0 : index
    %c0_7 = arith.constant 0 : index
    %15 = vector.load %arg3[%c0_6, %c0_7] : memref<2x1024xf32, #tpu.memory_space<vmem>>, vector<1x1024xf32>
    tpu.vector_store %arg3[%c0_6, %c0_7], %14 {strides = array<i32>} : memref<2x1024xf32, #tpu.memory_space<vmem>>, vector<1x1024xf32>,
    %16 = arith.extui %6 : vector<1x1024xi1> to vector<1x1024xi32>
    %17 = arith.sitofp %16 : vector<1x1024xi32> to vector<1x1024xf32>
    %c1 = arith.constant 1 : index
    %c0_8 = arith.constant 0 : index
    %18 = vector.load %arg3[%c1, %c0_8] : memref<2x1024xf32, #tpu.memory_space<vmem>>, vector<1x1024xf32>
    tpu.vector_store %arg3[%c1, %c0_8], %17 {strides = array<i32>} : memref<2x1024xf32, #tpu.memory_space<vmem>>, vector<1x1024xf32>,
    %19 = vector.broadcast %14 : vector<1x1024xf32> to vector<8x1024xf32>
    %20 = arith.mulf %19, %0 : vector<8x1024xf32>
    %21 = vector.broadcast %14 : vector<1x1024xf32> to vector<8x1024xf32>
    %22 = arith.addf %0, %21 : vector<8x1024xf32>
    %23 = arith.subf %22, %20 : vector<8x1024xf32>
    %24 = vector.shape_cast %6 : vector<1x1024xi1> to vector<1x1024xi1>
    %25 = vector.broadcast %24 : vector<1x1024xi1> to vector<8x1024xi1>
    %26 = arith.select %25, %23, %20 : vector<8x1024xi1>, vector<8x1024xf32>
    %c0_9 = arith.constant 0 : index
    %c0_10 = arith.constant 0 : index
    %27 = vector.load %arg2[%c0_9, %c0_10] : memref<8x1024xf32, #tpu.memory_space<vmem>>, vector<8x1024xf32>
    tpu.vector_store %arg2[%c0_9, %c0_10], %26 {strides = array<i32>} : memref<8x1024xf32, #tpu.memory_space<vmem>>, vector<8x1024xf32>,
    return
  }
  func.func @transform_0(%arg0: i32) -> (i32, i32) {
    %c0_i32 = arith.constant 0 : i32
    %c0_i32_0 = arith.constant 0 : i32
    return %c0_i32, %arg0 : i32, i32
  }
  func.func @transform_1(%arg0: i32) -> (i32, i32) {
    %c0_i32 = arith.constant 0 : i32
    %c0_i32_0 = arith.constant 0 : i32
    return %c0_i32, %arg0 : i32, i32
  }
  func.func @transform_2(%arg0: i32) -> (i32, i32) {
    %c0_i32 = arith.constant 0 : i32
    %c0_i32_0 = arith.constant 0 : i32
    return %c0_i32, %arg0 : i32, i32
  }
}

</mosaic_0001>

<llo_original>
// kernel: tpu_custom_call.1
$region0: #{tpu_custom_call.1}
  #allocation0 [shape = 'u32[]', space=smem, size = 0x4, offset = 0x4, fixed_abs, tag = 'smem constant byte address 0x4 - core index']
  #allocation1 [shape = 'u32[72,128]{1,0:T(1,128)}', space=vmem, size = 0x9000, scoped, tag = 'internal scratch']
  %s0 = inlined_call_operand.hbm [shape: f32[8,1024], index: 0, kind: input, shape index: {}]
  %s1 = inlined_call_operand.hbm [shape: f32[8,1024], index: 1, kind: output, shape index: {0}]
  %s2 = inlined_call_operand.hbm [shape: f32[2,1024], index: 2, kind: output, shape index: {1}]
  %3 = xla_tuple %s1, %s2
  %s4 = sld [smem:[#allocation0]]
  $region26: #{tpu_custom_call.1} parent=0
    _
  %s6 = ssub.s32 1, %s4
  %s7 = scalar_select 0, %s6, %s4
  $region1: #{tpu_custom_call.1} parent=0
    #allocation2 [shape = 'u8[32768]{0}', space=vmem, size = 0x8000, scoped, tag = 'input window, operand 0, single buffered']
    #allocation3 [shape = 's32[1]{0}', space=sflag, size = 0x4, scoped, tag = 'scoped memory for tpu_custom_call.1']
    #allocation4 [shape = 's32[1]{0}', space=sflag, size = 0x4, scoped, tag = 'scoped memory for tpu_custom_call.1']
    #allocation5 [shape = 'u8[32768]{0}', space=vmem, size = 0x8000, scoped, tag = 'output window, operand 0, single buffered']
    #allocation6 [shape = 'u8[8192]{0}', space=vmem, size = 0x2000, scoped, tag = 'output window, operand 1, single buffered']
    #allocation7 [shape = 's32[1]{0}', space=sflag, size = 0x4, scoped, tag = 'scoped memory for tpu_custom_call.1']
    %8 = vsyncpa [#allocation3], 0
    %9 = vsyncpa [#allocation4], 0
    %10 = vsyncpa [#allocation7], 0
    // Predicated region
    $region2: #{tpu_custom_call.1} parent=1 // pred_check
      _
    $region3: #{tpu_custom_call.1} parent=1 // pred_check_branch
      %12 = sbr.rel (0) target = $region5
    $region4: #{tpu_custom_call.1} parent=1 // pred_region
      %14 = vsyncadd [#allocation3], 0
      %s16 = sshll.u32 %s0, 4
      %s17 = int_to_ptr.hbm [resolvable:$true] %s16
      %s18 = sshll.u32 [#allocation2], 4
      %s19 = int_to_ptr.vmem [resolvable:$true] %s18
      %21 = dma.hbm_to_vmem [thread:$0]  %s17, 1024, %s19, [#allocation3]
    $region5: #{tpu_custom_call.1} parent=1 // pred_fallthru
      _
    // Predicated region
    $region6: #{tpu_custom_call.1} parent=1 // pred_check
      _
    $region7: #{tpu_custom_call.1} parent=1 // pred_check_branch
      %23 = sbr.rel (0) target = $region9
    $region8: #{tpu_custom_call.1} parent=1 // pred_region
      %25 = dma.done [#allocation3], 1024
    $region9: #{tpu_custom_call.1} parent=1 // pred_fallthru
      _
    %v26 = vld [vmem:[#allocation2] sm:$0xff]
    %v27 = vld [vmem:[#allocation2 + $0x8] sm:$0xff]
    %v28 = vld [vmem:[#allocation2 + $0x10] sm:$0xff]
    %v29 = vld [vmem:[#allocation2 + $0x18] sm:$0xff]
    %v30 = vld [vmem:[#allocation2 + $0x20] sm:$0xff]
    %v31 = vld [vmem:[#allocation2 + $0x28] sm:$0xff]
    %v32 = vld [vmem:[#allocation2 + $0x30] sm:$0xff]
    %v33 = vld [vmem:[#allocation2 + $0x38] sm:$0xff]
    %v34 = vrot.slane %v26, 4
    %v35 = vadd.f32 %v26, %v34
    %v36 = vrot.slane %v35, 2
    %v37 = vadd.f32 %v35, %v36
    %v38 = vrot.slane %v37, 1
    %v39 = vadd.f32 %v37, %v38
    %v40 = vrot.slane %v27, 4
    %v41 = vadd.f32 %v27, %v40
    %v42 = vrot.slane %v41, 2
    %v43 = vadd.f32 %v41, %v42
    %v44 = vrot.slane %v43, 1
    %v45 = vadd.f32 %v43, %v44
    %v46 = vrot.slane %v28, 4
    %v47 = vadd.f32 %v28, %v46
    %v48 = vrot.slane %v47, 2
    %v49 = vadd.f32 %v47, %v48
    %v50 = vrot.slane %v49, 1
    %v51 = vadd.f32 %v49, %v50
    %v52 = vrot.slane %v29, 4
    %v53 = vadd.f32 %v29, %v52
    %v54 = vrot.slane %v53, 2
    %v55 = vadd.f32 %v53, %v54
    %v56 = vrot.slane %v55, 1
    %v57 = vadd.f32 %v55, %v56
    %v58 = vrot.slane %v30, 4
    %v59 = vadd.f32 %v30, %v58
    %v60 = vrot.slane %v59, 2
    %v61 = vadd.f32 %v59, %v60
    %v62 = vrot.slane %v61, 1
    %v63 = vadd.f32 %v61, %v62
    %v64 = vrot.slane %v31, 4
    %v65 = vadd.f32 %v31, %v64
    %v66 = vrot.slane %v65, 2
    %v67 = vadd.f32 %v65, %v66
    %v68 = vrot.slane %v67, 1
    %v69 = vadd.f32 %v67, %v68
    %v70 = vrot.slane %v32, 4
    %v71 = vadd.f32 %v32, %v70
    %v72 = vrot.slane %v71, 2
    %v73 = vadd.f32 %v71, %v72
    %v74 = vrot.slane %v73, 1
    %v75 = vadd.f32 %v73, %v74
    %v76 = vrot.slane %v33, 4
    %v77 = vadd.f32 %v33, %v76
    %v78 = vrot.slane %v77, 2
    %v79 = vadd.f32 %v77, %v78
    %v80 = vrot.slane %v79, 1
    %v81 = vadd.f32 %v79, %v80
    %v82 = vrcp.pop 8.0
    %v83 = vmul.f32 8.0, %v82
    %v84 = vsub.f32 1.0, %v83
    %v85 = vmul.f32 %v82, %v84
    %v86 = vadd.f32 %v82, %v85
    %vm87 = vweird.f32 %v82
    %v88 = vsel %vm87, %v82, %v86
    %v89 = vmul.f32 %v39, %v88
    %v90 = vmul.f32 %v45, %v88
    %v91 = vmul.f32 %v51, %v88
    %v92 = vmul.f32 %v57, %v88
    %v93 = vmul.f32 %v63, %v88
    %v94 = vmul.f32 %v69, %v88
    %v95 = vmul.f32 %v75, %v88
    %v96 = vmul.f32 %v81, %v88
    %vm97 = vcmp.le.f32.partialorder %v89, 0.5
    %vm98 = vcmp.le.f32.partialorder %v90, 0.5
    %vm99 = vcmp.le.f32.partialorder %v91, 0.5
    %vm100 = vcmp.le.f32.partialorder %v92, 0.5
    %vm101 = vcmp.le.f32.partialorder %v93, 0.5
    %vm102 = vcmp.le.f32.partialorder %v94, 0.5
    %vm103 = vcmp.le.f32.partialorder %v95, 0.5
    %vm104 = vcmp.le.f32.partialorder %v96, 0.5
    %v105 = vsub.f32 0.5, %v89
    %v106 = vsub.f32 0.5, %v90
    %v107 = vsub.f32 0.5, %v91
    %v108 = vsub.f32 0.5, %v92
    %v109 = vsub.f32 0.5, %v93
    %v110 = vsub.f32 0.5, %v94
    %v111 = vsub.f32 0.5, %v95
    %v112 = vsub.f32 0.5, %v96
    %v113 = vsub.f32 1.0, %v89
    %v114 = vsub.f32 1.0, %v90
    %v115 = vsub.f32 1.0, %v91
    %v116 = vsub.f32 1.0, %v92
    %v117 = vsub.f32 1.0, %v93
    %v118 = vsub.f32 1.0, %v94
    %v119 = vsub.f32 1.0, %v95
    %v120 = vsub.f32 1.0, %v96
    %v121 = vrcp.pop %v113
    %v122 = vmul.f32 %v113, %v121
    %v123 = vsub.f32 1.0, %v122
    %v124 = vmul.f32 %v121, %v123
    %v125 = vadd.f32 %v121, %v124
    %vm126 = vweird.f32 %v113
    %vm127 = vweird.f32 %v121
    %vm128 = vmor %vm126, %vm127
    %v129 = vsel %vm128, %v121, %v125
    %v130 = vand.u32 2147483647, %v113
    %vm131 = vcmp.eq.f32.partialorder %v130, 8.507059e+37
    %v132 = vand.u32 %v113, 2147483648
    %v133 = vor.u32 1.1754944e-38, %v132
    %v134 = vsel %vm131, %v133, %v129
    %v135 = vmul.f32 %v105, %v134
    %v136 = vrcp.pop %v114
    %v137 = vmul.f32 %v114, %v136
    %v138 = vsub.f32 1.0, %v137
    %v139 = vmul.f32 %v136, %v138
    %v140 = vadd.f32 %v136, %v139
    %vm141 = vweird.f32 %v114
    %vm142 = vweird.f32 %v136
    %vm143 = vmor %vm141, %vm142
    %v144 = vsel %vm143, %v136, %v140
    %v145 = vand.u32 2147483647, %v114
    %vm146 = vcmp.eq.f32.partialorder %v145, 8.507059e+37
    %v147 = vand.u32 %v114, 2147483648
    %v148 = vor.u32 1.1754944e-38, %v147
    %v149 = vsel %vm146, %v148, %v144
    %v150 = vmul.f32 %v106, %v149
    %v151 = vrcp.pop %v115
    %v152 = vmul.f32 %v115, %v151
    %v153 = vsub.f32 1.0, %v152
    %v154 = vmul.f32 %v151, %v153
    %v155 = vadd.f32 %v151, %v154
    %vm156 = vweird.f32 %v115
    %vm157 = vweird.f32 %v151
    %vm158 = vmor %vm156, %vm157
    %v159 = vsel %vm158, %v151, %v155
    %v160 = vand.u32 2147483647, %v115
    %vm161 = vcmp.eq.f32.partialorder %v160, 8.507059e+37
    %v162 = vand.u32 %v115, 2147483648
    %v163 = vor.u32 1.1754944e-38, %v162
    %v164 = vsel %vm161, %v163, %v159
    %v165 = vmul.f32 %v107, %v164
    %v166 = vrcp.pop %v116
    %v167 = vmul.f32 %v116, %v166
    %v168 = vsub.f32 1.0, %v167
    %v169 = vmul.f32 %v166, %v168
    %v170 = vadd.f32 %v166, %v169
    %vm171 = vweird.f32 %v116
    %vm172 = vweird.f32 %v166
    %vm173 = vmor %vm171, %vm172
    %v174 = vsel %vm173, %v166, %v170
    %v175 = vand.u32 2147483647, %v116
    %vm176 = vcmp.eq.f32.partialorder %v175, 8.507059e+37
    %v177 = vand.u32 %v116, 2147483648
    %v178 = vor.u32 1.1754944e-38, %v177
    %v179 = vsel %vm176, %v178, %v174
    %v180 = vmul.f32 %v108, %v179
    %v181 = vrcp.pop %v117
    %v182 = vmul.f32 %v117, %v181
    %v183 = vsub.f32 1.0, %v182
    %v184 = vmul.f32 %v181, %v183
    %v185 = vadd.f32 %v181, %v184
    %vm186 = vweird.f32 %v117
    %vm187 = vweird.f32 %v181
    %vm188 = vmor %vm186, %vm187
    %v189 = vsel %vm188, %v181, %v185
    %v190 = vand.u32 2147483647, %v117
    %vm191 = vcmp.eq.f32.partialorder %v190, 8.507059e+37
    %v192 = vand.u32 %v117, 2147483648
    %v193 = vor.u32 1.1754944e-38, %v192
    %v194 = vsel %vm191, %v193, %v189
    %v195 = vmul.f32 %v109, %v194
    %v196 = vrcp.pop %v118
    %v197 = vmul.f32 %v118, %v196
    %v198 = vsub.f32 1.0, %v197
    %v199 = vmul.f32 %v196, %v198
    %v200 = vadd.f32 %v196, %v199
    %vm201 = vweird.f32 %v118
    %vm202 = vweird.f32 %v196
    %vm203 = vmor %vm201, %vm202
    %v204 = vsel %vm203, %v196, %v200
    %v205 = vand.u32 2147483647, %v118
    %vm206 = vcmp.eq.f32.partialorder %v205, 8.507059e+37
    %v207 = vand.u32 %v118, 2147483648
    %v208 = vor.u32 1.1754944e-38, %v207
    %v209 = vsel %vm206, %v208, %v204
    %v210 = vmul.f32 %v110, %v209
    %v211 = vrcp.pop %v119
    %v212 = vmul.f32 %v119, %v211
    %v213 = vsub.f32 1.0, %v212
    %v214 = vmul.f32 %v211, %v213
    %v215 = vadd.f32 %v211, %v214
    %vm216 = vweird.f32 %v119
    %vm217 = vweird.f32 %v211
    %vm218 = vmor %vm216, %vm217
    %v219 = vsel %vm218, %v211, %v215
    %v220 = vand.u32 2147483647, %v119
    %vm221 = vcmp.eq.f32.partialorder %v220, 8.507059e+37
    %v222 = vand.u32 %v119, 2147483648
    %v223 = vor.u32 1.1754944e-38, %v222
    %v224 = vsel %vm221, %v223, %v219
    %v225 = vmul.f32 %v111, %v224
    %v226 = vrcp.pop %v120
    %v227 = vmul.f32 %v120, %v226
    %v228 = vsub.f32 1.0, %v227
    %v229 = vmul.f32 %v226, %v228
    %v230 = vadd.f32 %v226, %v229
    %vm231 = vweird.f32 %v120
    %vm232 = vweird.f32 %v226
    %vm233 = vmor %vm231, %vm232
    %v234 = vsel %vm233, %v226, %v230
    %v235 = vand.u32 2147483647, %v120
    %vm236 = vcmp.eq.f32.partialorder %v235, 8.507059e+37
    %v237 = vand.u32 %v120, 2147483648
    %v238 = vor.u32 1.1754944e-38, %v237
    %v239 = vsel %vm236, %v238, %v234
    %v240 = vmul.f32 %v112, %v239
    %v241 = vrcp.pop %v89
    %v242 = vmul.f32 %v89, %v241
    %v243 = vsub.f32 1.0, %v242
    %v244 = vmul.f32 %v241, %v243
    %v245 = vadd.f32 %v241, %v244
    %vm246 = vweird.f32 %v89
    %vm247 = vweird.f32 %v241
    %vm248 = vmor %vm246, %vm247
    %v249 = vsel %vm248, %v241, %v245
    %v250 = vand.u32 2147483647, %v89
    %vm251 = vcmp.eq.f32.partialorder %v250, 8.507059e+37
    %v252 = vand.u32 %v89, 2147483648
    %v253 = vor.u32 1.1754944e-38, %v252
    %v254 = vsel %vm251, %v253, %v249
    %v255 = vmul.f32 0.5, %v254
    %v256 = vrcp.pop %v90
    %v257 = vmul.f32 %v90, %v256
    %v258 = vsub.f32 1.0, %v257
    %v259 = vmul.f32 %v256, %v258
    %v260 = vadd.f32 %v256, %v259
    %vm261 = vweird.f32 %v90
    %vm262 = vweird.f32 %v256
    %vm263 = vmor %vm261, %vm262
    %v264 = vsel %vm263, %v256, %v260
    %v265 = vand.u32 2147483647, %v90
    %vm266 = vcmp.eq.f32.partialorder %v265, 8.507059e+37
    %v267 = vand.u32 %v90, 2147483648
    %v268 = vor.u32 1.1754944e-38, %v267
    %v269 = vsel %vm266, %v268, %v264
    %v270 = vmul.f32 0.5, %v269
    %v271 = vrcp.pop %v91
    %v272 = vmul.f32 %v91, %v271
    %v273 = vsub.f32 1.0, %v272
    %v274 = vmul.f32 %v271, %v273
    %v275 = vadd.f32 %v271, %v274
    %vm276 = vweird.f32 %v91
    %vm277 = vweird.f32 %v271
    %vm278 = vmor %vm276, %vm277
    %v279 = vsel %vm278, %v271, %v275
    %v280 = vand.u32 2147483647, %v91
    %vm281 = vcmp.eq.f32.partialorder %v280, 8.507059e+37
    %v282 = vand.u32 %v91, 2147483648
    %v283 = vor.u32 1.1754944e-38, %v282
    %v284 = vsel %vm281, %v283, %v279
    %v285 = vmul.f32 0.5, %v284
    %v286 = vrcp.pop %v92
    %v287 = vmul.f32 %v92, %v286
    %v288 = vsub.f32 1.0, %v287
    %v289 = vmul.f32 %v286, %v288
    %v290 = vadd.f32 %v286, %v289
    %vm291 = vweird.f32 %v92
    %vm292 = vweird.f32 %v286
    %vm293 = vmor %vm291, %vm292
    %v294 = vsel %vm293, %v286, %v290
    %v295 = vand.u32 2147483647, %v92
    %vm296 = vcmp.eq.f32.partialorder %v295, 8.507059e+37
    %v297 = vand.u32 %v92, 2147483648
    %v298 = vor.u32 1.1754944e-38, %v297
    %v299 = vsel %vm296, %v298, %v294
    %v300 = vmul.f32 0.5, %v299
    %v301 = vrcp.pop %v93
    %v302 = vmul.f32 %v93, %v301
    %v303 = vsub.f32 1.0, %v302
    %v304 = vmul.f32 %v301, %v303
    %v305 = vadd.f32 %v301, %v304
    %vm306 = vweird.f32 %v93
    %vm307 = vweird.f32 %v301
    %vm308 = vmor %vm306, %vm307
    %v309 = vsel %vm308, %v301, %v305
    %v310 = vand.u32 2147483647, %v93
    %vm311 = vcmp.eq.f32.partialorder %v310, 8.507059e+37
    %v312 = vand.u32 %v93, 2147483648
    %v313 = vor.u32 1.1754944e-38, %v312
    %v314 = vsel %vm311, %v313, %v309
    %v315 = vmul.f32 0.5, %v314
    %v316 = vrcp.pop %v94
    %v317 = vmul.f32 %v94, %v316
    %v318 = vsub.f32 1.0, %v317
    %v319 = vmul.f32 %v316, %v318
    %v320 = vadd.f32 %v316, %v319
    %vm321 = vweird.f32 %v94
    %vm322 = vweird.f32 %v316
    %vm323 = vmor %vm321, %vm322
    %v324 = vsel %vm323, %v316, %v320
    %v325 = vand.u32 2147483647, %v94
    %vm326 = vcmp.eq.f32.partialorder %v325, 8.507059e+37
    %v327 = vand.u32 %v94, 2147483648
    %v328 = vor.u32 1.1754944e-38, %v327
    %v329 = vsel %vm326, %v328, %v324
    %v330 = vmul.f32 0.5, %v329
    %v331 = vrcp.pop %v95
    %v332 = vmul.f32 %v95, %v331
    %v333 = vsub.f32 1.0, %v332
    %v334 = vmul.f32 %v331, %v333
    %v335 = vadd.f32 %v331, %v334
    %vm336 = vweird.f32 %v95
    %vm337 = vweird.f32 %v331
    %vm338 = vmor %vm336, %vm337
    %v339 = vsel %vm338, %v331, %v335
    %v340 = vand.u32 2147483647, %v95
    %vm341 = vcmp.eq.f32.partialorder %v340, 8.507059e+37
    %v342 = vand.u32 %v95, 2147483648
    %v343 = vor.u32 1.1754944e-38, %v342
    %v344 = vsel %vm341, %v343, %v339
    %v345 = vmul.f32 0.5, %v344
    %v346 = vrcp.pop %v96
    %v347 = vmul.f32 %v96, %v346
    %v348 = vsub.f32 1.0, %v347
    %v349 = vmul.f32 %v346, %v348
    %v350 = vadd.f32 %v346, %v349
    %vm351 = vweird.f32 %v96
    %vm352 = vweird.f32 %v346
    %vm353 = vmor %vm351, %vm352
    %v354 = vsel %vm353, %v346, %v350
    %v355 = vand.u32 2147483647, %v96
    %vm356 = vcmp.eq.f32.partialorder %v355, 8.507059e+37
    %v357 = vand.u32 %v96, 2147483648
    %v358 = vor.u32 1.1754944e-38, %v357
    %v359 = vsel %vm356, %v358, %v354
    %v360 = vmul.f32 0.5, %v359
    %v361 = vsel %vm97, %v135, %v255
    %v362 = vsel %vm98, %v150, %v270
    %v363 = vsel %vm99, %v165, %v285
    %v364 = vsel %vm100, %v180, %v300
    %v365 = vsel %vm101, %v195, %v315
    %v366 = vsel %vm102, %v210, %v330
    %v367 = vsel %vm103, %v225, %v345
    %v368 = vsel %vm104, %v240, %v360
    %v377 = vrot.slane %v362, 7
    %v378 = vrot.slane %v363, 6
    %v379 = vrot.slane %v364, 5
    %v380 = vrot.slane %v365, 4
    %v381 = vrot.slane %v366, 3
    %v382 = vrot.slane %v367, 2
    %v383 = vrot.slane %v368, 1
    %vm384 = vcmask 1040384
    %v385 = vsel %vm384, %v361, %v377
    %vm386 = vcmask 1042434
    %v387 = vsel %vm386, %v378, %v379
    %vm388 = vcmask 1041408
    %v389 = vsel %vm388, %v385, %v387
    %vm390 = vcmask 1044484
    %v391 = vsel %vm390, %v380, %v381
    %vm392 = vcmask 1046534
    %v393 = vsel %vm392, %v382, %v383
    %vm394 = vcmask 1045508
    %v395 = vsel %vm394, %v391, %v393
    %vm396 = vcmask 1043456
    %v397 = vsel %vm396, %v389, %v395
    %399 = vst [vmem:[#allocation6] ss:$2 sm:$0xff] %v397
    %v400 = vsel %vm97, 1, 0
    %v401 = vsel %vm98, 1, 0
    %v402 = vsel %vm99, 1, 0
    %v403 = vsel %vm100, 1, 0
    %v404 = vsel %vm101, 1, 0
    %v405 = vsel %vm102, 1, 0
    %v406 = vsel %vm103, 1, 0
    %v407 = vsel %vm104, 1, 0
    %v408 = vcvt.s32.f32 %v400
    %v409 = vcvt.s32.f32 %v401
    %v410 = vcvt.s32.f32 %v402
    %v411 = vcvt.s32.f32 %v403
    %v412 = vcvt.s32.f32 %v404
    %v413 = vcvt.s32.f32 %v405
    %v414 = vcvt.s32.f32 %v406
    %v415 = vcvt.s32.f32 %v407
    %v424 = vrot.slane %v409, 7
    %v425 = vrot.slane %v410, 6
    %v426 = vrot.slane %v411, 5
    %v427 = vrot.slane %v412, 4
    %v428 = vrot.slane %v413, 3
    %v429 = vrot.slane %v414, 2
    %v430 = vrot.slane %v415, 1
    %v431 = vsel %vm384, %v408, %v424
    %v432 = vsel %vm386, %v425, %v426
    %v433 = vsel %vm388, %v431, %v432
    %v434 = vsel %vm390, %v427, %v428
    %v435 = vsel %vm392, %v429, %v430
    %v436 = vsel %vm394, %v434, %v435
    %v437 = vsel %vm396, %v433, %v436
    %s439 = scalar_lea.vmem [#allocation6], 1
    %440 = vst [vmem:[%s439] ss:$2 sm:$0xff] %v437
    %v441 = vmul.f32 %v361, %v26
    %v442 = vmul.f32 %v362, %v27
    %v443 = vmul.f32 %v363, %v28
    %v444 = vmul.f32 %v364, %v29
    %v445 = vmul.f32 %v365, %v30
    %v446 = vmul.f32 %v366, %v31
    %v447 = vmul.f32 %v367, %v32
    %v448 = vmul.f32 %v368, %v33
    %v449 = vadd.f32 %v26, %v361
    %v450 = vadd.f32 %v27, %v362
    %v451 = vadd.f32 %v28, %v363
    %v452 = vadd.f32 %v29, %v364
    %v453 = vadd.f32 %v30, %v365
    %v454 = vadd.f32 %v31, %v366
    %v455 = vadd.f32 %v32, %v367
    %v456 = vadd.f32 %v33, %v368
    %v457 = vsub.f32 %v449, %v441
    %v458 = vsub.f32 %v450, %v442
    %v459 = vsub.f32 %v451, %v443
    %v460 = vsub.f32 %v452, %v444
    %v461 = vsub.f32 %v453, %v445
    %v462 = vsub.f32 %v454, %v446
    %v463 = vsub.f32 %v455, %v447
    %v464 = vsub.f32 %v456, %v448
    %vm465 = vcmp.eq.s32.totalorder %v400, 1
    %vm466 = vcmp.eq.s32.totalorder %v401, 1
    %vm467 = vcmp.eq.s32.totalorder %v402, 1
    %vm468 = vcmp.eq.s32.totalorder %v403, 1
    %vm469 = vcmp.eq.s32.totalorder %v404, 1
    %vm470 = vcmp.eq.s32.totalorder %v405, 1
    %vm471 = vcmp.eq.s32.totalorder %v406, 1
    %vm472 = vcmp.eq.s32.totalorder %v407, 1
    %v473 = vsel %vm465, %v457, %v441
    %v474 = vsel %vm466, %v458, %v442
    %v475 = vsel %vm467, %v459, %v443
    %v476 = vsel %vm468, %v460, %v444
    %v477 = vsel %vm469, %v461, %v445
    %v478 = vsel %vm470, %v462, %v446
    %v479 = vsel %vm471, %v463, %v447
    %v480 = vsel %vm472, %v464, %v448
    %481 = vst [vmem:[#allocation5] sm:$0xff] %v473
    %482 = vst [vmem:[#allocation5 + $0x8] sm:$0xff] %v474
    %483 = vst [vmem:[#allocation5 + $0x10] sm:$0xff] %v475
    %484 = vst [vmem:[#allocation5 + $0x18] sm:$0xff] %v476
    %485 = vst [vmem:[#allocation5 + $0x20] sm:$0xff] %v477
    %486 = vst [vmem:[#allocation5 + $0x28] sm:$0xff] %v478
    %487 = vst [vmem:[#allocation5 + $0x30] sm:$0xff] %v479
    %488 = vst [vmem:[#allocation5 + $0x38] sm:$0xff] %v480
    // Predicated region
    $region10: #{tpu_custom_call.1} parent=1 // pred_check
      _
    $region11: #{tpu_custom_call.1} parent=1 // pred_check_branch
      %490 = sbr.rel (0) target = $region13
    $region12: #{tpu_custom_call.1} parent=1 // pred_region
      %492 = vsyncadd [#allocation4], 0
      %s494 = sshll.u32 [#allocation5], 4
      %s495 = int_to_ptr.vmem [resolvable:$true] %s494
      %s496 = sshll.u32 %s1, 4
      %s497 = int_to_ptr.hbm [resolvable:$true] %s496
      %499 = dma.vmem_to_hbm [thread:$0]  %s495, 1024, %s497, [#allocation4]
    $region13: #{tpu_custom_call.1} parent=1 // pred_fallthru
      _
    // Predicated region
    $region14: #{tpu_custom_call.1} parent=1 // pred_check
      _
    $region15: #{tpu_custom_call.1} parent=1 // pred_check_branch
      %501 = sbr.rel (0) target = $region17
    $region16: #{tpu_custom_call.1} parent=1 // pred_region
      %503 = vsyncadd [#allocation7], 0
      %s505 = sshll.u32 [#allocation6], 4
      %s506 = int_to_ptr.vmem [resolvable:$true] %s505
      %s507 = sshll.u32 %s2, 4
      %s508 = int_to_ptr.hbm [resolvable:$true] %s507
      %510 = dma.vmem_to_hbm [thread:$0]  %s506, 256, %s508, [#allocation7]
    $region17: #{tpu_custom_call.1} parent=1 // pred_fallthru
      _
    // Predicated region
    $region18: #{tpu_custom_call.1} parent=1 // pred_check
      _
    $region19: #{tpu_custom_call.1} parent=1 // pred_check_branch
      %512 = sbr.rel (0) target = $region21
    $region20: #{tpu_custom_call.1} parent=1 // pred_region
      %514 = dma.done [#allocation4], 1024
    $region21: #{tpu_custom_call.1} parent=1 // pred_fallthru
      _
    // Predicated region
    $region22: #{tpu_custom_call.1} parent=1 // pred_check
      _
    $region23: #{tpu_custom_call.1} parent=1 // pred_check_branch
      %516 = sbr.rel (0) target = $region25
    $region24: #{tpu_custom_call.1} parent=1 // pred_region
      %518 = dma.done [#allocation7], 256
    $region25: #{tpu_custom_call.1} parent=1 // pred_fallthru
      _
    %519 = vsyncpa [#allocation3], 1
    %520 = vsyncpa [#allocation4], 1
    %521 = vsyncpa [#allocation7], 1

</llo_original>
